<compile_context>
chip_gen: v7x
topology: tpu7x:2x2x1
jax: 0.10.0
libtpu: 0.0.40
codegen_flags: <defaults>
</compile_context>

<pallas_src>
import jax
import jax.numpy as jnp
from jax import lax
from jax.experimental import pallas as pl
from jax.experimental.pallas import tpu as pltpu


def _rnn_block_kernel(x_ref, wih_ref, whh_ref, b_ref, o_ref, h_ref, proj_ref):
    """One grid step = one (batch block, time block) of the RNN.

    x_ref   : (B_blk, TB, I)       input block (original dtype, cast in-kernel)
    wih_ref : (I, H)               W_ih^T  (projection compute dtype, e.g. bf16)
    whh_ref : (H, H)               W_hh^T  (recurrence dtype, f32 by default)
    b_ref   : (1, H)               b_ih + b_hh (f32)
    o_ref   : (B_blk, TB//k, k*H)  lane-dense output block (k = 128 // H)
    h_ref   : (B_blk, H)           f32 hidden state carried across time blocks
    proj_ref: (B_blk, TB, H)       f32 VMEM scratch for the hoisted projection
    """
    t_blk = pl.program_id(1)

    @pl.when(t_blk == 0)
    def _():
        h_ref[...] = jnp.zeros_like(h_ref)

    b_blk, tb, in_dim = x_ref.shape
    hid = h_ref.shape[1]
    k = o_ref.shape[2] // hid            # hidden vectors packed per output row
    n_groups = tb // k
    cdt = wih_ref.dtype                  # projection MXU dtype (bf16 or f32)

    # ---- Hoisted input projection: one big MXU matmul (M = B_blk*TB) for the
    # whole time block instead of TB tiny ones.  Result goes to a VMEM scratch
    # so it is never held live in vregs across the serial recurrence.
    x_blk = x_ref[...].astype(cdt)                                   # (B_blk, TB, I)
    proj = jnp.dot(
        x_blk.reshape(b_blk * tb, in_dim),
        wih_ref[...],
        preferred_element_type=jnp.float32,
    ) + b_ref[...]                                                   # + bias (f32)
    proj_ref[...] = proj.reshape(b_blk, tb, hid)

    whh = whh_ref[...]                   # resident weights; f32 recurrence
    h0 = h_ref[...]

    # ---- Serial recurrence.  fori_loop over groups of k steps bounds vreg
    # live ranges; within a group the k steps are unrolled and packed into one
    # lane-dense (B_blk, k*H) store (128 lanes when H | 128).
    def group_body(g, h):
        start = pl.multiple_of(g * k, k)
        grp = proj_ref[:, pl.ds(start, k), :]                        # (B_blk, k, H)
        packed = []
        for j in range(k):
            pre = grp[:, j, :] + jnp.dot(h, whh,
                                         preferred_element_type=jnp.float32)
            h = jnp.tanh(pre)                                        # f32 recurrence
            packed.append(h.astype(o_ref.dtype))
        row = jnp.concatenate(packed, axis=-1)                       # (B_blk, k*H)
        o_ref[:, pl.ds(g, 1), :] = row[:, None, :]
        return h

    h_final = lax.fori_loop(0, n_groups, group_body, h0)
    h_ref[...] = h_final                 # spill hidden state once per time block


def _padded_bytes(shape, itemsize):
    """Rough VMEM footprint of an array padded to (8, 128) tiles."""
    s = list(shape)
    s[-1] = pl.cdiv(s[-1], 128) * 128
    if len(s) >= 2:
        s[-2] = pl.cdiv(s[-2], 8) * 8
    n = 1
    for d in s:
        n *= d
    return n * itemsize


def _tensorcores_per_chip():
    """2 for megacore / multi-TC parts (v4, v5p, v7x); 1 for v5e / v6e."""
    try:
        kind = jax.devices()[0].device_kind.lower()
    except Exception:
        return 1
    return 2 if any(tag in kind for tag in ("v4", "v5p", "v7")) else 1


def time_embeddings_forward(x, w_ih, w_hh, b_ih, b_hh, *,
                            compute_dtype=jnp.bfloat16,
                            recurrent_dtype=jnp.float32,
                            out_dtype=None,
                            max_time_block=256,
                            vmem_budget_bytes=32 << 20):
    """RNN forward. x: (B, T, I). Returns out: (B, T, H) in out_dtype (default x.dtype)."""
    B, T, I = x.shape
    H = w_ih.shape[0]                            # w_ih: (H, I), w_hh: (H, H)
    out_dtype = x.dtype if out_dtype is None else out_dtype

    # Lane packing factor for the output (biggest single measured lever).
    k = (128 // H) if (H < 128 and 128 % H == 0) else 1

    # Split batch across TensorCores only when the chip actually has 2 TCs.
    n_bblk = 2 if (_tensorcores_per_chip() == 2 and B >= 2 and B % 2 == 0) else 1
    B_blk = B // n_bblk

    x_item = jnp.dtype(x.dtype).itemsize
    out_item = jnp.dtype(out_dtype).itemsize
    cdt_item = jnp.dtype(compute_dtype).itemsize
    rdt_item = jnp.dtype(recurrent_dtype).itemsize

    def vmem_need(tb):
        need = 2 * _padded_bytes((B_blk, tb, I), x_item)              # x (2-buffered)
        need += 2 * _padded_bytes((B_blk, tb // k, k * H), out_item)  # out (2-buffered)
        need += 2 * _padded_bytes((I, H), cdt_item)                   # W_ih^T
        need += 2 * _padded_bytes((H, H), rdt_item)                   # W_hh^T
        need += 2 * _padded_bytes((1, H), 4)                          # bias
        need += _padded_bytes((B_blk, H), 4)                          # h scratch
        need += _padded_bytes((B_blk, tb, H), 4)                      # proj scratch
        return need

    # Time block: multiple of 8*k (keeps both the x block and the lane-packed
    # output block (8,128)-legal), as large as the VMEM budget allows.
    base = 8 * k
    cap = min(max_time_block, pl.cdiv(T, base) * base)
    cap = max(base, (cap // base) * base)
    TB = base
    for cand in range(cap, base - 1, -base):
        if vmem_need(cand) <= vmem_budget_bytes:
            TB = cand
            break
    T_pad = pl.cdiv(T, TB) * TB
    n_tblk = T_pad // TB

    # Zero-pad the time axis so every block is full; padded steps only produce
    # trailing garbage hidden states which are sliced away below.
    x_in = x if T_pad == T else jnp.pad(x, ((0, 0), (0, T_pad - T), (0, 0)))

    wih_t = jnp.transpose(w_ih, (1, 0)).astype(compute_dtype)        # (I, H)
    whh_t = jnp.transpose(w_hh, (1, 0)).astype(recurrent_dtype)      # (H, H), f32
    bias = (b_ih.astype(jnp.float32) + b_hh.astype(jnp.float32)).reshape(1, H)

    out = pl.pallas_call(
        _rnn_block_kernel,
        out_shape=jax.ShapeDtypeStruct((B, T_pad // k, k * H), out_dtype),
        grid_spec=pltpu.PrefetchScalarGridSpec(
            num_scalar_prefetch=0,
            grid=(n_bblk, n_tblk),
            in_specs=[
                pl.BlockSpec((B_blk, TB, I), lambda b, t: (b, t, 0)),
                # Resident weights / bias (constant index_map -> fetched once).
                # TODO(synk): for large H on v7x, single-buffer these with
                # pipeline_mode=pl.Buffered(1) to fit the 64 MiB VMEM.
                pl.BlockSpec((I, H), lambda b, t: (0, 0)),
                pl.BlockSpec((H, H), lambda b, t: (0, 0)),
                pl.BlockSpec((1, H), lambda b, t: (0, 0)),
            ],
            out_specs=pl.BlockSpec((B_blk, TB // k, k * H),
                                   lambda b, t: (b, t, 0)),
            scratch_shapes=[
                pltpu.VMEM((B_blk, H), jnp.float32),        # carried hidden state
                pltpu.VMEM((B_blk, TB, H), jnp.float32),    # hoisted projection
            ],
        ),
        compiler_params=pltpu.CompilerParams(
            # Batch blocks independent -> parallel (sharded across TCs on 2-TC
            # parts, each with its own scratch); time carries the recurrence.
            dimension_semantics=("parallel", "arbitrary"),
            vmem_limit_bytes=int(min(max(vmem_need(TB) + (4 << 20), 16 << 20),
                                     112 << 20)),
        ),
    )(x_in, wih_t, whh_t, bias)

    # Free row-major view back to (B, T_pad, H); drop time padding.
    return out.reshape(B, T_pad, H)[:, :T, :]


def _reference_rnn(x, w_ih, w_hh, b_ih, b_hh):
    """Pure-JAX reference matching torch.nn.RNN (tanh, batch_first, h0 = 0)."""
    B, T, I = x.shape
    H = w_ih.shape[0]
    h = jnp.zeros((B, H), jnp.float32)
    outs = []
    for t in range(T):
        h = jnp.tanh(x[:, t, :] @ w_ih.T + b_ih + h @ w_hh.T + b_hh)
        outs.append(h)
    return jnp.stack(outs, axis=1)


if __name__ == "__main__":
    # Small, deterministic config: d_model(H)=32, inputsize(I)=16, B=2, T=8.
    B, T, I, H = 2, 8, 16, 32
    key = jax.random.PRNGKey(0)
    kx, k1, k2, k3, k4, kx2 = jax.random.split(key, 6)

    bound = 1.0 / jnp.sqrt(H)   # PyTorch RNN init range (values deterministic here)
    x = jax.random.normal(kx, (B, T, I), jnp.float32)
    w_ih = jax.random.uniform(k1, (H, I), jnp.float32, -bound, bound)
    w_hh = jax.random.uniform(k2, (H, H), jnp.float32, -bound, bound)
    b_ih = jax.random.uniform(k3, (H,), jnp.float32, -bound, bound)
    b_hh = jax.random.uniform(k4, (H,), jnp.float32, -bound, bound)

    ref = _reference_rnn(x, w_ih, w_hh, b_ih, b_hh)

    # Default path: bf16 MXU input projection, f32 recurrence, f32 output.
    out = jax.block_until_ready(time_embeddings_forward(x, w_ih, w_hh, b_ih, b_hh))
    assert out.shape == (B, T, H)
    assert jnp.max(jnp.abs(out - ref)) < 5e-2, "bf16-path mismatch vs reference RNN"

    # Full f32 variant (tight check of the recurrence structure).
    out_f32 = jax.block_until_ready(
        time_embeddings_forward(x, w_ih, w_hh, b_ih, b_hh,
                                compute_dtype=jnp.float32))
    assert jnp.max(jnp.abs(out_f32 - ref)) < 1e-3, "f32-path mismatch vs reference RNN"

    # Longer ragged sequence: exercises time padding, multiple time blocks and
    # the hidden-state carry across grid steps (max_time_block forced small).
    B2, T2 = 4, 70
    x2 = jax.random.normal(kx2, (B2, T2, I), jnp.float32)
    ref2 = _reference_rnn(x2, w_ih, w_hh, b_ih, b_hh)
    out2 = jax.block_until_ready(
        time_embeddings_forward(x2, w_ih, w_hh, b_ih, b_hh,
                                compute_dtype=jnp.float32, max_time_block=32))
    assert out2.shape == (B2, T2, H)
    assert jnp.max(jnp.abs(out2 - ref2)) < 2e-3, "multi-block mismatch vs reference RNN"

    print("KERNEL_OK")
</pallas_src>

<mosaic_0001>
module attributes {stable_mosaic.version = 11 : i64} {
  func.func @_rnn_block_kernel(%arg0: i32, %arg1: i32, %arg2: memref<2x32x16xf32, #tpu.memory_space<vmem>>, %arg3: memref<16x32xbf16, #tpu.memory_space<vmem>>, %arg4: memref<32x32xf32, #tpu.memory_space<vmem>>, %arg5: memref<1x32xf32, #tpu.memory_space<vmem>>, %arg6: memref<2x8x128xf32, #tpu.memory_space<vmem>>, %arg7: memref<2x32xf32, #tpu.memory_space<vmem>>, %arg8: memref<2x32x32xf32, #tpu.memory_space<vmem>>) attributes {dimension_semantics = [#tpu.dimension_semantics<parallel>, #tpu.dimension_semantics<arbitrary>], iteration_bounds = array<i64: 1, 1>, scalar_prefetch = 0 : i64, scratch_operands = 2 : i64, tpu.core_type = #tpu.core_type<tc>, window_params = [{transform_indices = @transform_0, window_bounds = array<i64: 2, 32, 16>}, {pipeline_mode = #tpu.pipeline_mode<synchronous>, transform_indices = @transform_1, window_bounds = array<i64: 16, 32>}, {pipeline_mode = #tpu.pipeline_mode<synchronous>, transform_indices = @transform_2, window_bounds = array<i64: 32, 32>}, {pipeline_mode = #tpu.pipeline_mode<synchronous>, transform_indices = @transform_3, window_bounds = array<i64: 1, 32>}, {transform_indices = @transform_4, window_bounds = array<i64: 2, 8, 128>}]} {
    %c0_i32 = arith.constant 0 : i32
    %0 = arith.cmpi eq, %arg1, %c0_i32 : i32
    %1 = arith.extui %0 : i1 to i32
    %c0_i32_0 = arith.constant 0 : i32
    %2 = arith.cmpi ne, %1, %c0_i32_0 : i32
    scf.if %2 {
      %cst_18 = arith.constant 0.000000e+00 : f32
      %18 = vector.broadcast %cst_18 : f32 to vector<2x32xf32>
      %c0_19 = arith.constant 0 : index
      %c0_20 = arith.constant 0 : index
      %19 = vector.load %arg7[%c0_19, %c0_20] : memref<2x32xf32, #tpu.memory_space<vmem>>, vector<2x32xf32>
      tpu.vector_store %arg7[%c0_19, %c0_20], %18 {strides = array<i32>} : memref<2x32xf32, #tpu.memory_space<vmem>>, vector<2x32xf32>,
    } else {
    }
    %c0 = arith.constant 0 : index
    %c0_1 = arith.constant 0 : index
    %c0_2 = arith.constant 0 : index
    %3 = vector.load %arg2[%c0, %c0_1, %c0_2] : memref<2x32x16xf32, #tpu.memory_space<vmem>>, vector<2x32x16xf32>
    %4 = arith.truncf %3 : vector<2x32x16xf32> to vector<2x32x16xbf16>
    %5 = vector.shape_cast %4 : vector<2x32x16xbf16> to vector<64x16xbf16>
    %c0_3 = arith.constant 0 : index
    %c0_4 = arith.constant 0 : index
    %6 = vector.load %arg3[%c0_3, %c0_4] : memref<16x32xbf16, #tpu.memory_space<vmem>>, vector<16x32xbf16>
    %cst = arith.constant dense<0.000000e+00> : vector<64x32xf32>
    %7 = tpu.matmul %5, %6, %cst {dimension_numbers = #tpu.dot_dimension_numbers<[1], [0], [0], [1], [0, 0, 1, 1], [], []>} : vector<64x16xbf16>, vector<16x32xbf16>, vector<64x32xf32> -> vector<64x32xf32>
    %c0_5 = arith.constant 0 : index
    %c0_6 = arith.constant 0 : index
    %8 = vector.load %arg5[%c0_5, %c0_6] : memref<1x32xf32, #tpu.memory_space<vmem>>, vector<1x32xf32>
    %9 = vector.broadcast %8 : vector<1x32xf32> to vector<64x32xf32>
    %10 = arith.addf %7, %9 : vector<64x32xf32>
    %11 = vector.shape_cast %10 : vector<64x32xf32> to vector<2x32x32xf32>
    %c0_7 = arith.constant 0 : index
    %c0_8 = arith.constant 0 : index
    %c0_9 = arith.constant 0 : index
    %12 = vector.load %arg8[%c0_7, %c0_8, %c0_9] : memref<2x32x32xf32, #tpu.memory_space<vmem>>, vector<2x32x32xf32>
    tpu.vector_store %arg8[%c0_7, %c0_8, %c0_9], %11 {strides = array<i32>} : memref<2x32x32xf32, #tpu.memory_space<vmem>>, vector<2x32x32xf32>,
    %c0_10 = arith.constant 0 : index
    %c0_11 = arith.constant 0 : index
    %13 = vector.load %arg4[%c0_10, %c0_11] : memref<32x32xf32, #tpu.memory_space<vmem>>, vector<32x32xf32>
    %c0_12 = arith.constant 0 : index
    %c0_13 = arith.constant 0 : index
    %14 = vector.load %arg7[%c0_12, %c0_13] : memref<2x32xf32, #tpu.memory_space<vmem>>, vector<2x32xf32>
    %c0_i32_14 = arith.constant 0 : i32
    %c8_i32 = arith.constant 8 : i32
    %15 = arith.addi %c0_i32_14, %c8_i32 : i32
    %c1_i32 = arith.constant 1 : i32
    %16 = scf.for %arg9 = %c0_i32_14 to %15 step %c1_i32 iter_args(%arg10 = %14) -> (vector<2x32xf32>)  : i32 {
      %c4_i32 = arith.constant 4 : i32
      %18 = arith.muli %arg9, %c4_i32 : i32
      %19 = tpu.assume_multiple %18, 4 : i32
      %c0_18 = arith.constant 0 : index
      %20 = arith.index_cast %19 : i32 to index
      %c0_19 = arith.constant 0 : index
      %21 = vector.load %arg8[%c0_18, %20, %c0_19] : memref<2x32x32xf32, #tpu.memory_space<vmem>>, vector<2x4x32xf32>
      %22 = vector.extract_strided_slice %21 {offsets = [0, 0, 0], sizes = [2, 1, 32], strides = [1, 1, 1]} : vector<2x4x32xf32> to vector<2x1x32xf32>
      %23 = vector.shape_cast %22 : vector<2x1x32xf32> to vector<2x32xf32>
      %cst_20 = arith.constant dense<0.000000e+00> : vector<2x32xf32>
      %24 = tpu.matmul %arg10, %13, %cst_20 {dimension_numbers = #tpu.dot_dimension_numbers<[1], [0], [0], [1], [0, 0, 1, 1], [], []>} : vector<2x32xf32>, vector<32x32xf32>, vector<2x32xf32> -> vector<2x32xf32>
      %25 = arith.addf %23, %24 : vector<2x32xf32>
      %26 = math.tanh %25 : vector<2x32xf32>
      %27 = vector.extract_strided_slice %21 {offsets = [0, 1, 0], sizes = [2, 1, 32], strides = [1, 1, 1]} : vector<2x4x32xf32> to vector<2x1x32xf32>
      %28 = vector.shape_cast %27 : vector<2x1x32xf32> to vector<2x32xf32>
      %cst_21 = arith.constant dense<0.000000e+00> : vector<2x32xf32>
      %29 = tpu.matmul %26, %13, %cst_21 {dimension_numbers = #tpu.dot_dimension_numbers<[1], [0], [0], [1], [0, 0, 1, 1], [], []>} : vector<2x32xf32>, vector<32x32xf32>, vector<2x32xf32> -> vector<2x32xf32>
      %30 = arith.addf %28, %29 : vector<2x32xf32>
      %31 = math.tanh %30 : vector<2x32xf32>
      %32 = vector.extract_strided_slice %21 {offsets = [0, 2, 0], sizes = [2, 1, 32], strides = [1, 1, 1]} : vector<2x4x32xf32> to vector<2x1x32xf32>
      %33 = vector.shape_cast %32 : vector<2x1x32xf32> to vector<2x32xf32>
      %cst_22 = arith.constant dense<0.000000e+00> : vector<2x32xf32>
      %34 = tpu.matmul %31, %13, %cst_22 {dimension_numbers = #tpu.dot_dimension_numbers<[1], [0], [0], [1], [0, 0, 1, 1], [], []>} : vector<2x32xf32>, vector<32x32xf32>, vector<2x32xf32> -> vector<2x32xf32>
      %35 = arith.addf %33, %34 : vector<2x32xf32>
      %36 = math.tanh %35 : vector<2x32xf32>
      %37 = vector.extract_strided_slice %21 {offsets = [0, 3, 0], sizes = [2, 1, 32], strides = [1, 1, 1]} : vector<2x4x32xf32> to vector<2x1x32xf32>
      %38 = vector.shape_cast %37 : vector<2x1x32xf32> to vector<2x32xf32>
      %cst_23 = arith.constant dense<0.000000e+00> : vector<2x32xf32>
      %39 = tpu.matmul %36, %13, %cst_23 {dimension_numbers = #tpu.dot_dimension_numbers<[1], [0], [0], [1], [0, 0, 1, 1], [], []>} : vector<2x32xf32>, vector<32x32xf32>, vector<2x32xf32> -> vector<2x32xf32>
      %40 = arith.addf %38, %39 : vector<2x32xf32>
      %41 = math.tanh %40 : vector<2x32xf32>
      %42 = tpu.concatenate %26, %31, %36, %41 in 1 : vector<2x32xf32>, vector<2x32xf32>, vector<2x32xf32>, vector<2x32xf32> -> vector<2x128xf32>
      %43 = vector.shape_cast %42 : vector<2x128xf32> to vector<2x1x128xf32>
      %c0_24 = arith.constant 0 : index
      %44 = arith.index_cast %arg9 : i32 to index
      %c0_25 = arith.constant 0 : index
      %45 = vector.load %arg6[%c0_24, %44, %c0_25] : memref<2x8x128xf32, #tpu.memory_space<vmem>>, vector<2x1x128xf32>
      tpu.vector_store %arg6[%c0_24, %44, %c0_25], %43 {strides = array<i32>} : memref<2x8x128xf32, #tpu.memory_space<vmem>>, vector<2x1x128xf32>,
      scf.yield %41 : vector<2x32xf32>
    }
    %c8_i32_15 = arith.constant 8 : i32
    %c0_16 = arith.constant 0 : index
    %c0_17 = arith.constant 0 : index
    %17 = vector.load %arg7[%c0_16, %c0_17] : memref<2x32xf32, #tpu.memory_space<vmem>>, vector<2x32xf32>
    tpu.vector_store %arg7[%c0_16, %c0_17], %16 {strides = array<i32>} : memref<2x32xf32, #tpu.memory_space<vmem>>, vector<2x32xf32>,
    return
  }
  func.func @transform_0(%arg0: i32, %arg1: i32) -> (i32, i32, i32) {
    %c0_i32 = arith.constant 0 : i32
    %c0_i32_0 = arith.constant 0 : i32
    return %arg0, %arg1, %c0_i32 : i32, i32, i32
  }
  func.func @transform_1(%arg0: i32, %arg1: i32) -> (i32, i32) {
    %c0_i32 = arith.constant 0 : i32
    %c0_i32_0 = arith.constant 0 : i32
    %c0_i32_1 = arith.constant 0 : i32
    return %c0_i32, %c0_i32_0 : i32, i32
  }
  func.func @transform_2(%arg0: i32, %arg1: i32) -> (i32, i32) {
    %c0_i32 = arith.constant 0 : i32
    %c0_i32_0 = arith.constant 0 : i32
    %c0_i32_1 = arith.constant 0 : i32
    return %c0_i32, %c0_i32_0 : i32, i32
  }
  func.func @transform_3(%arg0: i32, %arg1: i32) -> (i32, i32) {
    %c0_i32 = arith.constant 0 : i32
    %c0_i32_0 = arith.constant 0 : i32
    %c0_i32_1 = arith.constant 0 : i32
    return %c0_i32, %c0_i32_0 : i32, i32
  }
  func.func @transform_4(%arg0: i32, %arg1: i32) -> (i32, i32, i32) {
    %c0_i32 = arith.constant 0 : i32
    %c0_i32_0 = arith.constant 0 : i32
    return %arg0, %arg1, %c0_i32 : i32, i32, i32
  }
}

</mosaic_0001>

<llo_original>
// kernel: tpu_custom_call.1
$region0: #{tpu_custom_call.1}
  #allocation0 [shape = 'u32[]', space=smem, size = 0x4, offset = 0x4, fixed_abs, tag = 'smem constant byte address 0x4 - core index']
  #allocation1 [shape = 'u32[144,128]{1,0:T(1,128)}', space=vmem, size = 0x12000, scoped, tag = 'internal scratch']
  #allocation2 [shape = 'f32[2,32]{1,0:T(2,128)}', space=vmem, size = 0x400, scoped, tag = 'scratch operand']
  #allocation3 [shape = 'f32[2,32,32]{2,1,0:T(8,128)}', space=vmem, size = 0x8000, scoped, tag = 'scratch operand']
  %s0 = inlined_call_operand.vmem [shape: f32[2,32,16], index: 0, kind: input, shape index: {}]
  %s1 = inlined_call_operand.vmem [shape: bf16[16,32], index: 1, kind: input, shape index: {}]
  %s2 = inlined_call_operand.vmem [shape: f32[32,32], index: 2, kind: input, shape index: {}]
  %s3 = inlined_call_operand.vmem [shape: f32[1,32], index: 3, kind: input, shape index: {}]
  %s4 = inlined_call_operand.hbm [shape: f32[2,8,128], index: 4, kind: output, shape index: {}]
  %s5 = sld [smem:[#allocation0]]
  $region37: #{tpu_custom_call.1} parent=0
    _
  %s7 = ssub.s32 1, %s5
  %s8 = scalar_select 0, %s7, %s5
  $region1: #{tpu_custom_call.1} parent=0
    #allocation4 [shape = 'u8[8192]{0}', space=vmem, size = 0x2000, scoped, tag = 'output window, operand 0, single buffered']
    #allocation5 [shape = 's32[1]{0}', space=sflag, size = 0x4, scoped, tag = 'scoped memory for tpu_custom_call.1']
    %9 = vsyncpa [#allocation5], 0
    // Predicated region
    $region2: #{tpu_custom_call.1} parent=1 // pred_check
      _
    $region3: #{tpu_custom_call.1} parent=1 // pred_check_branch
      %11 = sbr.rel (0) target = $region5
    $region4: #{tpu_custom_call.1} parent=1 // pred_region
      _
    $region5: #{tpu_custom_call.1} parent=1 // pred_fallthru
      _
    // Predicated region
    $region6: #{tpu_custom_call.1} parent=1 // pred_check
      _
    $region7: #{tpu_custom_call.1} parent=1 // pred_check_branch
      %13 = sbr.rel (0) target = $region9
    $region8: #{tpu_custom_call.1} parent=1 // pred_region
      _
    $region9: #{tpu_custom_call.1} parent=1 // pred_fallthru
      _
    // Predicated region
    $region10: #{tpu_custom_call.1} parent=1 // pred_check
      _
    $region11: #{tpu_custom_call.1} parent=1 // pred_check_branch
      %15 = sbr.rel (0) target = $region13
    $region12: #{tpu_custom_call.1} parent=1 // pred_region
      _
    $region13: #{tpu_custom_call.1} parent=1 // pred_fallthru
      _
    // Predicated region
    $region14: #{tpu_custom_call.1} parent=1 // pred_check
      _
    $region15: #{tpu_custom_call.1} parent=1 // pred_check_branch
      %17 = sbr.rel (0) target = $region17
    $region16: #{tpu_custom_call.1} parent=1 // pred_region
      _
    $region17: #{tpu_custom_call.1} parent=1 // pred_fallthru
      _
    %p19 = scmp.eq.s32.totalorder 0, 0
    // Predicated region
    $region18: #{tpu_custom_call.1} parent=1 // pred_check
      %p20 = pneg %p19
    $region19: #{tpu_custom_call.1} parent=1 // pred_check_branch
      %22 = sbr.rel (%p20) target = $region21
    $region20: #{tpu_custom_call.1} parent=1 // pred_region
      %vm23 = vcmask 254976
      %24 = vst.msk [vmem:[#allocation2] sm:$0x3] %vm23, 0.0
    $region21: #{tpu_custom_call.1} parent=1 // pred_fallthru
      _
    %v25 = vld [vmem:[%s0] sm:$0xff]
    %v26 = vld [vmem:[%s0 + $0x8] sm:$0xff]
    %v27 = vld [vmem:[%s0 + $0x10] sm:$0xff]
    %v28 = vld [vmem:[%s0 + $0x18] sm:$0xff]
    %v29 = vld [vmem:[%s0 + $0x20] sm:$0xff]
    %v30 = vld [vmem:[%s0 + $0x28] sm:$0xff]
    %v31 = vld [vmem:[%s0 + $0x30] sm:$0xff]
    %v32 = vld [vmem:[%s0 + $0x38] sm:$0xff]
    %v33 = vpack.c.bf16 %v26, %v25
    %v34 = vpack.c.bf16 %v28, %v27
    %v35 = vpack.c.bf16 %v30, %v29
    %v36 = vpack.c.bf16 %v32, %v31
    %v37 = vld [vmem:[%s1] sm:$0xf]
    %v38 = vld [vmem:[%s1 + $0x4] sm:$0xf]
    %v39 = vld [vmem:[%s3] sm:$0x1]
    %v41 = vlaneseq
    %v42 = vshrl.u32 %v41, 7
    %v43 = vsub.s32 0, %v42
    %v44 = vrot.slane %v39, %v43
    %v48 = vunpack.c.l.b16 %v37
    %v49 = vunpack.c.l.b16 %v38
    %v50 = vpack.c.b16 %v49, %v48
    %vm52 = vcmask 130048
    %v54 = vsel %vm52, %v33, 0
    %v57 = vsel %vm52, %v34, 0
    %v60 = vsel %vm52, %v35, 0
    %v63 = vsel %vm52, %v36, 0
    %65 = vmatprep.subr.bf16.mxu0 0
    %66 = vmatpush1.bf16.msra.mxu0 %v50
    %67 = vmatprep.subr.bf16.mxu0 0
    %68 = vmatpush1.bf16.msra.mxu0 0
    %69 = vmatprep.subr.bf16.mxu0 0
    %70 = vmatpush1.bf16.msra.mxu0 0
    %71 = vmatprep.subr.bf16.mxu0 0
    %72 = vmatpush1.bf16.msra.mxu0 0
    %73 = vmatprep.subr.bf16.mxu0 0
    %74 = vmatpush1.bf16.msra.mxu0 0
    %75 = vmatprep.subr.bf16.mxu0 0
    %76 = vmatpush1.bf16.msra.mxu0 0
    %77 = vmatprep.subr.bf16.mxu0 0
    %78 = vmatpush1.bf16.msra.mxu0 0
    %79 = vmatprep.subr.bf16.mxu0 0
    %80 = vmatpush1.bf16.msra.mxu0 0
    %81 = vmatprep.subr.bf16.mxu0 0
    %82 = vmatpush1.bf16.msra.mxu0 0
    %83 = vmatprep.subr.bf16.mxu0 0
    %84 = vmatpush1.bf16.msra.mxu0 0
    %85 = vmatprep.subr.bf16.mxu0 0
    %86 = vmatpush1.bf16.msra.mxu0 0
    %87 = vmatprep.subr.bf16.mxu0 0
    %88 = vmatpush1.bf16.msra.mxu0 0
    %89 = vmatprep.subr.bf16.mxu0 0
    %90 = vmatpush1.bf16.msra.mxu0 0
    %91 = vmatprep.subr.bf16.mxu0 0
    %92 = vmatpush1.bf16.msra.mxu0 0
    %93 = vmatprep.subr.bf16.mxu0 0
    %94 = vmatpush1.bf16.msra.mxu0 0
    %95 = vmatprep.subr.bf16.mxu0 0
    %96 = vmatpush1.bf16.msra.mxu0 0
    %97 = vmatprep.mubr.bf16.mxu0 0
    %98 = vmatmul.mubr.bf16.gmra.mrb[0].mxu0 %v54
    %v99 = vpop.f32.mrb[0].mxu0
    %v100 = vadd.f32 %v44, %v99
    %v101 = vpop.f32.mrb[0].mxu0
    %v102 = vpop.f32.mrb[0].mxu0
    %v103 = vadd.f32 %v44, %v102
    %v104 = vpop.f32.mrb[0].mxu0
    %105 = vmatprep.mubr.bf16.mxu0 0
    %106 = vmatmul.mubr.bf16.gmra.mrb[0].mxu0 %v57
    %v107 = vpop.f32.mrb[0].mxu0
    %v108 = vadd.f32 %v44, %v107
    %v109 = vpop.f32.mrb[0].mxu0
    %v110 = vpop.f32.mrb[0].mxu0
    %v111 = vadd.f32 %v44, %v110
    %v112 = vpop.f32.mrb[0].mxu0
    %113 = vmatprep.mubr.bf16.mxu0 0
    %114 = vmatmul.mubr.bf16.gmra.mrb[0].mxu0 %v60
    %v115 = vpop.f32.mrb[0].mxu0
    %v116 = vadd.f32 %v44, %v115
    %v117 = vpop.f32.mrb[0].mxu0
    %v118 = vpop.f32.mrb[0].mxu0
    %v119 = vadd.f32 %v44, %v118
    %v120 = vpop.f32.mrb[0].mxu0
    %121 = vmatprep.mubr.bf16.mxu0 0
    %122 = vmatmul.mubr.bf16.gmra.mrb[0].mxu0 %v63
    %v123 = vpop.f32.mrb[0].mxu0
    %v124 = vadd.f32 %v44, %v123
    %v125 = vpop.f32.mrb[0].mxu0
    %v126 = vpop.f32.mrb[0].mxu0
    %v127 = vadd.f32 %v44, %v126
    %v128 = vpop.f32.mrb[0].mxu0
    %129 = vdwg.mxu0
    %vm130 = vcmask 261120
    %131 = vst.msk [vmem:[#allocation3] sm:$0xff] %vm130, %v100
    %132 = vst.msk [vmem:[#allocation3 + $0x8] sm:$0xff] %vm130, %v103
    %133 = vst.msk [vmem:[#allocation3 + $0x10] sm:$0xff] %vm130, %v108
    %134 = vst.msk [vmem:[#allocation3 + $0x18] sm:$0xff] %vm130, %v111
    %135 = vst.msk [vmem:[#allocation3 + $0x20] sm:$0xff] %vm130, %v116
    %136 = vst.msk [vmem:[#allocation3 + $0x28] sm:$0xff] %vm130, %v119
    %137 = vst.msk [vmem:[#allocation3 + $0x30] sm:$0xff] %vm130, %v124
    %138 = vst.msk [vmem:[#allocation3 + $0x38] sm:$0xff] %vm130, %v127
    %v139 = vld [vmem:[%s2] sm:$0xff]
    %v140 = vld [vmem:[%s2 + $0x8] sm:$0xff]
    %v141 = vld [vmem:[%s2 + $0x10] sm:$0xff]
    %v142 = vld [vmem:[%s2 + $0x18] sm:$0xff]
    %v143 = vld [vmem:[#allocation2] sm:$0x3]
    loop: start=0, step=1, limit=8
    $region22: #{tpu_custom_call.1} parent=1 // loop_pre_header
      _
    $region23: #{tpu_custom_call.1} parent=1 // loop_header
      %s145 = sphi 0, %s149
      %p146 = scmp.ge.s32.totalorder %s145, 8
      %v150 = vphi %v143, %v503
    $region24: #{tpu_custom_call.1} parent=1 // loop_header_branch
      %148 = sbr.rel (%p146) target = $region28
    $region25: #{tpu_custom_call.1} parent=1 // loop_body
      %s151 = smul.u32 %s145, 4
      %s152 = scalar_lea.vmem [#allocation3], %s151
      %v153 = vld [vmem:[%s152] sm:$0xf]
      %v154 = vld [vmem:[%s152 + $0x20] sm:$0xf]
      %v156 = vsel %vm130, %v150, 0
      %158 = vmatprep.subr.mxu0 0.0
      %159 = vmatpush1.msra.mxu0 %v139
      %160 = vmatprep.subr.mxu0 0.0
      %161 = vmatpush1.msra.mxu0 %v140
      %162 = vmatprep.subr.mxu0 0.0
      %163 = vmatpush1.msra.mxu0 %v141
      %164 = vmatprep.subr.mxu0 0.0
      %165 = vmatpush1.msra.mxu0 %v142
      %166 = vmatprep.subr.mxu0 0.0
      %167 = vmatpush1.msra.mxu0 0.0
      %168 = vmatprep.subr.mxu0 0.0
      %169 = vmatpush1.msra.mxu0 0.0
      %170 = vmatprep.subr.mxu0 0.0
      %171 = vmatpush1.msra.mxu0 0.0
      %172 = vmatprep.subr.mxu0 0.0
      %173 = vmatpush1.msra.mxu0 0.0
      %174 = vmatprep.subr.mxu0 0.0
      %175 = vmatpush1.msra.mxu0 0.0
      %176 = vmatprep.subr.mxu0 0.0
      %177 = vmatpush1.msra.mxu0 0.0
      %178 = vmatprep.subr.mxu0 0.0
      %179 = vmatpush1.msra.mxu0 0.0
      %180 = vmatprep.subr.mxu0 0.0
      %181 = vmatpush1.msra.mxu0 0.0
      %182 = vmatprep.subr.mxu0 0.0
      %183 = vmatpush1.msra.mxu0 0.0
      %184 = vmatprep.subr.mxu0 0.0
      %185 = vmatpush1.msra.mxu0 0.0
      %186 = vmatprep.subr.mxu0 0.0
      %187 = vmatpush1.msra.mxu0 0.0
      %188 = vmatprep.subr.mxu0 0.0
      %189 = vmatpush1.msra.mxu0 0.0
      %190 = vmatprep.subr.mxu0 0.0
      %191 = vmatpush1.msra.mxu0 0.0
      %192 = vmatprep.subr.mxu0 0.0
      %193 = vmatpush1.msra.mxu0 0.0
      %194 = vmatprep.subr.mxu0 0.0
      %195 = vmatpush1.msra.mxu0 0.0
      %196 = vmatprep.subr.mxu0 0.0
      %197 = vmatpush1.msra.mxu0 0.0
      %198 = vmatprep.subr.mxu0 0.0
      %199 = vmatpush1.msra.mxu0 0.0
      %200 = vmatprep.subr.mxu0 0.0
      %201 = vmatpush1.msra.mxu0 0.0
      %202 = vmatprep.subr.mxu0 0.0
      %203 = vmatpush1.msra.mxu0 0.0
      %204 = vmatprep.subr.mxu0 0.0
      %205 = vmatpush1.msra.mxu0 0.0
      %206 = vmatprep.subr.mxu0 0.0
      %207 = vmatpush1.msra.mxu0 0.0
      %208 = vmatprep.subr.mxu0 0.0
      %209 = vmatpush1.msra.mxu0 0.0
      %210 = vmatprep.subr.mxu0 0.0
      %211 = vmatpush1.msra.mxu0 0.0
      %212 = vmatprep.subr.mxu0 0.0
      %213 = vmatpush1.msra.mxu0 0.0
      %214 = vmatprep.subr.mxu0 0.0
      %215 = vmatpush1.msra.mxu0 0.0
      %216 = vmatprep.subr.mxu0 0.0
      %217 = vmatpush1.msra.mxu0 0.0
      %218 = vmatprep.subr.mxu0 0.0
      %219 = vmatpush1.msra.mxu0 0.0
      %220 = vmatprep.subr.mxu0 0.0
      %221 = vmatpush1.msra.mxu0 0.0
      %222 = vmatprep.mubr.f32.mxu0 0.0
      %223 = vmatmul.mubr.f32.gmra.mrb[0].mxu0 %v156
      %v224 = vpop.f32.mrb[0].mxu0
      %v225 = vadd.f32 0.0, %v224
      %v226 = vpop.f32.mrb[0].mxu0
      %227 = vdwg.mxu0
      %v229 = vrot.slane %v225, 1
      %v232 = vadd.f32 %v153, %v225
      %v233 = vadd.f32 %v154, %v229
      %v234 = vtanh.pop %v232
      %v235 = vtanh.pop %v233
      %v238 = vrot.slane %v235, 7
      %vm239 = vcmask 1041409
      %v240 = vsel %vm239, %v238, %v234
      %v241 = vsel %vm130, %v240, 0
      %243 = vmatprep.subr.mxu0 0.0
      %244 = vmatpush1.msra.mxu0 %v139
      %245 = vmatprep.subr.mxu0 0.0
      %246 = vmatpush1.msra.mxu0 %v140
      %247 = vmatprep.subr.mxu0 0.0
      %248 = vmatpush1.msra.mxu0 %v141
      %249 = vmatprep.subr.mxu0 0.0
      %250 = vmatpush1.msra.mxu0 %v142
      %251 = vmatprep.subr.mxu0 0.0
      %252 = vmatpush1.msra.mxu0 0.0
      %253 = vmatprep.subr.mxu0 0.0
      %254 = vmatpush1.msra.mxu0 0.0
      %255 = vmatprep.subr.mxu0 0.0
      %256 = vmatpush1.msra.mxu0 0.0
      %257 = vmatprep.subr.mxu0 0.0
      %258 = vmatpush1.msra.mxu0 0.0
      %259 = vmatprep.subr.mxu0 0.0
      %260 = vmatpush1.msra.mxu0 0.0
      %261 = vmatprep.subr.mxu0 0.0
      %262 = vmatpush1.msra.mxu0 0.0
      %263 = vmatprep.subr.mxu0 0.0
      %264 = vmatpush1.msra.mxu0 0.0
      %265 = vmatprep.subr.mxu0 0.0
      %266 = vmatpush1.msra.mxu0 0.0
      %267 = vmatprep.subr.mxu0 0.0
      %268 = vmatpush1.msra.mxu0 0.0
      %269 = vmatprep.subr.mxu0 0.0
      %270 = vmatpush1.msra.mxu0 0.0
      %271 = vmatprep.subr.mxu0 0.0
      %272 = vmatpush1.msra.mxu0 0.0
      %273 = vmatprep.subr.mxu0 0.0
      %274 = vmatpush1.msra.mxu0 0.0
      %275 = vmatprep.subr.mxu0 0.0
      %276 = vmatpush1.msra.mxu0 0.0
      %277 = vmatprep.subr.mxu0 0.0
      %278 = vmatpush1.msra.mxu0 0.0
      %279 = vmatprep.subr.mxu0 0.0
      %280 = vmatpush1.msra.mxu0 0.0
      %281 = vmatprep.subr.mxu0 0.0
      %282 = vmatpush1.msra.mxu0 0.0
      %283 = vmatprep.subr.mxu0 0.0
      %284 = vmatpush1.msra.mxu0 0.0
      %285 = vmatprep.subr.mxu0 0.0
      %286 = vmatpush1.msra.mxu0 0.0
      %287 = vmatprep.subr.mxu0 0.0
      %288 = vmatpush1.msra.mxu0 0.0
      %289 = vmatprep.subr.mxu0 0.0
      %290 = vmatpush1.msra.mxu0 0.0
      %291 = vmatprep.subr.mxu0 0.0
      %292 = vmatpush1.msra.mxu0 0.0
      %293 = vmatprep.subr.mxu0 0.0
      %294 = vmatpush1.msra.mxu0 0.0
      %295 = vmatprep.subr.mxu0 0.0
      %296 = vmatpush1.msra.mxu0 0.0
      %297 = vmatprep.subr.mxu0 0.0
      %298 = vmatpush1.msra.mxu0 0.0
      %299 = vmatprep.subr.mxu0 0.0
      %300 = vmatpush1.msra.mxu0 0.0
      %301 = vmatprep.subr.mxu0 0.0
      %302 = vmatpush1.msra.mxu0 0.0
      %303 = vmatprep.subr.mxu0 0.0
      %304 = vmatpush1.msra.mxu0 0.0
      %305 = vmatprep.subr.mxu0 0.0
      %306 = vmatpush1.msra.mxu0 0.0
      %307 = vmatprep.mubr.f32.mxu0 0.0
      %308 = vmatmul.mubr.f32.gmra.mrb[0].mxu0 %v241
      %v309 = vpop.f32.mrb[0].mxu0
      %v310 = vadd.f32 0.0, %v309
      %v311 = vpop.f32.mrb[0].mxu0
      %312 = vdwg.mxu0
      %v314 = vrot.slane %v310, 7
      %v317 = vadd.f32 %v153, %v314
      %v318 = vadd.f32 %v154, %v310
      %v319 = vtanh.pop %v317
      %v320 = vtanh.pop %v318
      %v323 = vrot.slane %v319, 1
      %v324 = vsel %vm239, %v320, %v323
      %v325 = vsel %vm130, %v324, 0
      %327 = vmatprep.subr.mxu0 0.0
      %328 = vmatpush1.msra.mxu0 %v139
      %329 = vmatprep.subr.mxu0 0.0
      %330 = vmatpush1.msra.mxu0 %v140
      %331 = vmatprep.subr.mxu0 0.0
      %332 = vmatpush1.msra.mxu0 %v141
      %333 = vmatprep.subr.mxu0 0.0
      %334 = vmatpush1.msra.mxu0 %v142
      %335 = vmatprep.subr.mxu0 0.0
      %336 = vmatpush1.msra.mxu0 0.0
      %337 = vmatprep.subr.mxu0 0.0
      %338 = vmatpush1.msra.mxu0 0.0
      %339 = vmatprep.subr.mxu0 0.0
      %340 = vmatpush1.msra.mxu0 0.0
      %341 = vmatprep.subr.mxu0 0.0
      %342 = vmatpush1.msra.mxu0 0.0
      %343 = vmatprep.subr.mxu0 0.0
      %344 = vmatpush1.msra.mxu0 0.0
      %345 = vmatprep.subr.mxu0 0.0
      %346 = vmatpush1.msra.mxu0 0.0
      %347 = vmatprep.subr.mxu0 0.0
      %348 = vmatpush1.msra.mxu0 0.0
      %349 = vmatprep.subr.mxu0 0.0
      %350 = vmatpush1.msra.mxu0 0.0
      %351 = vmatprep.subr.mxu0 0.0
      %352 = vmatpush1.msra.mxu0 0.0
      %353 = vmatprep.subr.mxu0 0.0
      %354 = vmatpush1.msra.mxu0 0.0
      %355 = vmatprep.subr.mxu0 0.0
      %356 = vmatpush1.msra.mxu0 0.0
      %357 = vmatprep.subr.mxu0 0.0
      %358 = vmatpush1.msra.mxu0 0.0
      %359 = vmatprep.subr.mxu0 0.0
      %360 = vmatpush1.msra.mxu0 0.0
      %361 = vmatprep.subr.mxu0 0.0
      %362 = vmatpush1.msra.mxu0 0.0
      %363 = vmatprep.subr.mxu0 0.0
      %364 = vmatpush1.msra.mxu0 0.0
      %365 = vmatprep.subr.mxu0 0.0
      %366 = vmatpush1.msra.mxu0 0.0
      %367 = vmatprep.subr.mxu0 0.0
      %368 = vmatpush1.msra.mxu0 0.0
      %369 = vmatprep.subr.mxu0 0.0
      %370 = vmatpush1.msra.mxu0 0.0
      %371 = vmatprep.subr.mxu0 0.0
      %372 = vmatpush1.msra.mxu0 0.0
      %373 = vmatprep.subr.mxu0 0.0
      %374 = vmatpush1.msra.mxu0 0.0
      %375 = vmatprep.subr.mxu0 0.0
      %376 = vmatpush1.msra.mxu0 0.0
      %377 = vmatprep.subr.mxu0 0.0
      %378 = vmatpush1.msra.mxu0 0.0
      %379 = vmatprep.subr.mxu0 0.0
      %380 = vmatpush1.msra.mxu0 0.0
      %381 = vmatprep.subr.mxu0 0.0
      %382 = vmatpush1.msra.mxu0 0.0
      %383 = vmatprep.subr.mxu0 0.0
      %384 = vmatpush1.msra.mxu0 0.0
      %385 = vmatprep.subr.mxu0 0.0
      %386 = vmatpush1.msra.mxu0 0.0
      %387 = vmatprep.subr.mxu0 0.0
      %388 = vmatpush1.msra.mxu0 0.0
      %389 = vmatprep.subr.mxu0 0.0
      %390 = vmatpush1.msra.mxu0 0.0
      %391 = vmatprep.mubr.f32.mxu0 0.0
      %392 = vmatmul.mubr.f32.gmra.mrb[0].mxu0 %v325
      %v393 = vpop.f32.mrb[0].mxu0
      %v394 = vadd.f32 0.0, %v393
      %v395 = vpop.f32.mrb[0].mxu0
      %396 = vdwg.mxu0
      %v398 = vrot.slane %v394, 6
      %v399 = vrot.slane %v394, 7
      %v402 = vadd.f32 %v153, %v398
      %v403 = vadd.f32 %v154, %v399
      %v404 = vtanh.pop %v402
      %v405 = vtanh.pop %v403
      %v408 = vrot.slane %v404, 2
      %v409 = vrot.slane %v405, 1
      %v410 = vsel %vm239, %v409, %v408
      %v411 = vsel %vm130, %v410, 0
      %413 = vmatprep.subr.mxu0 0.0
      %414 = vmatpush1.msra.mxu0 %v139
      %415 = vmatprep.subr.mxu0 0.0
      %416 = vmatpush1.msra.mxu0 %v140
      %417 = vmatprep.subr.mxu0 0.0
      %418 = vmatpush1.msra.mxu0 %v141
      %419 = vmatprep.subr.mxu0 0.0
      %420 = vmatpush1.msra.mxu0 %v142
      %421 = vmatprep.subr.mxu0 0.0
      %422 = vmatpush1.msra.mxu0 0.0
      %423 = vmatprep.subr.mxu0 0.0
      %424 = vmatpush1.msra.mxu0 0.0
      %425 = vmatprep.subr.mxu0 0.0
      %426 = vmatpush1.msra.mxu0 0.0
      %427 = vmatprep.subr.mxu0 0.0
      %428 = vmatpush1.msra.mxu0 0.0
      %429 = vmatprep.subr.mxu0 0.0
      %430 = vmatpush1.msra.mxu0 0.0
      %431 = vmatprep.subr.mxu0 0.0
      %432 = vmatpush1.msra.mxu0 0.0
      %433 = vmatprep.subr.mxu0 0.0
      %434 = vmatpush1.msra.mxu0 0.0
      %435 = vmatprep.subr.mxu0 0.0
      %436 = vmatpush1.msra.mxu0 0.0
      %437 = vmatprep.subr.mxu0 0.0
      %438 = vmatpush1.msra.mxu0 0.0
      %439 = vmatprep.subr.mxu0 0.0
      %440 = vmatpush1.msra.mxu0 0.0
      %441 = vmatprep.subr.mxu0 0.0
      %442 = vmatpush1.msra.mxu0 0.0
      %443 = vmatprep.subr.mxu0 0.0
      %444 = vmatpush1.msra.mxu0 0.0
      %445 = vmatprep.subr.mxu0 0.0
      %446 = vmatpush1.msra.mxu0 0.0
      %447 = vmatprep.subr.mxu0 0.0
      %448 = vmatpush1.msra.mxu0 0.0
      %449 = vmatprep.subr.mxu0 0.0
      %450 = vmatpush1.msra.mxu0 0.0
      %451 = vmatprep.subr.mxu0 0.0
      %452 = vmatpush1.msra.mxu0 0.0
      %453 = vmatprep.subr.mxu0 0.0
      %454 = vmatpush1.msra.mxu0 0.0
      %455 = vmatprep.subr.mxu0 0.0
      %456 = vmatpush1.msra.mxu0 0.0
      %457 = vmatprep.subr.mxu0 0.0
      %458 = vmatpush1.msra.mxu0 0.0
      %459 = vmatprep.subr.mxu0 0.0
      %460 = vmatpush1.msra.mxu0 0.0
      %461 = vmatprep.subr.mxu0 0.0
      %462 = vmatpush1.msra.mxu0 0.0
      %463 = vmatprep.subr.mxu0 0.0
      %464 = vmatpush1.msra.mxu0 0.0
      %465 = vmatprep.subr.mxu0 0.0
      %466 = vmatpush1.msra.mxu0 0.0
      %467 = vmatprep.subr.mxu0 0.0
      %468 = vmatpush1.msra.mxu0 0.0
      %469 = vmatprep.subr.mxu0 0.0
      %470 = vmatpush1.msra.mxu0 0.0
      %471 = vmatprep.subr.mxu0 0.0
      %472 = vmatpush1.msra.mxu0 0.0
      %473 = vmatprep.subr.mxu0 0.0
      %474 = vmatpush1.msra.mxu0 0.0
      %475 = vmatprep.subr.mxu0 0.0
      %476 = vmatpush1.msra.mxu0 0.0
      %477 = vmatprep.mubr.f32.mxu0 0.0
      %478 = vmatmul.mubr.f32.gmra.mrb[0].mxu0 %v411
      %v479 = vpop.f32.mrb[0].mxu0
      %v480 = vadd.f32 0.0, %v479
      %v481 = vpop.f32.mrb[0].mxu0
      %482 = vdwg.mxu0
      %v484 = vrot.slane %v480, 5
      %v485 = vrot.slane %v480, 6
      %v488 = vadd.f32 %v153, %v484
      %v489 = vadd.f32 %v154, %v485
      %v490 = vtanh.pop %v488
      %v491 = vtanh.pop %v489
      %493 = vrot.lane.b32.xlu0 %v324, 32
      %v494 = vpop.permute.xlu0 %493
      %496 = vrot.lane.b32.xlu0 %v410, 64
      %v497 = vpop.permute.xlu0 %496
      %v501 = vrot.slane %v490, 3
      %v502 = vrot.slane %v491, 2
      %v503 = vsel %vm239, %v502, %v501
      %504 = vrot.lane.b32.xlu0 %v503, 96
      %v505 = vpop.permute.xlu0 %504
      %v507 = vsel %vm130, %v240, %v494
      %vm508 = vcmask 523264
      %v509 = vsel %vm508, %v507, %v497
      %vm510 = vcmask 785408
      %v511 = vsel %vm510, %v509, %v505
      %v514 = vunpack.c.l.s4 1966171168
      %v515 = vunpack.c.0.s8 %v514
      %v516 = vlaneseq
      %v517 = vshrl.u32 %v516, 7
      %v518 = vsub.s32 %v515, %v517
      %v519 = vrot.slane %v511, %v518
      %v520 = vcombine.high %v519, %v519
      %v522 = vunpack.c.l.s4 1966171168
      %v523 = vunpack.c.0.s8 %v522
      %v524 = vlaneseq
      %v525 = vshrl.u32 %v524, 7
      %v526 = vsub.s32 %v523, %v525
      %v527 = vrot.slane %v519, %v526
      %v529 = vunpack.c.l.s4 1966171168
      %v530 = vunpack.c.0.s8 %v529
      %v531 = vlaneseq
      %v532 = vshrl.u32 %v531, 7
      %v533 = vsub.s32 %v530, %v532
      %v534 = vrot.slane %v520, %v533
      %s537 = scalar_lea.vmem [#allocation4], %s145
      %538 = vst [vmem:[%s537] sm:$0x1] %v527
      %539 = vst [vmem:[%s537 + $0x8] sm:$0x1] %v534
    $region26: #{tpu_custom_call.1} parent=1 // loop_footer
      %s149 = sadd.s32 1, %s145
    $region27: #{tpu_custom_call.1} parent=1 // loop_footer_branch
      %144 = sbr.rel target = $region23
    $region28: #{tpu_custom_call.1} parent=1 // loop_exit
      _
    %vm541 = vcmask 254976
    %542 = vst.msk [vmem:[#allocation2] sm:$0x3] %vm541, %v150
    // Predicated region
    $region29: #{tpu_custom_call.1} parent=1 // pred_check
      _
    $region30: #{tpu_custom_call.1} parent=1 // pred_check_branch
      %544 = sbr.rel (0) target = $region32
    $region31: #{tpu_custom_call.1} parent=1 // pred_region
      %s546 = ssub.s32 256, 256
      %547 = vsyncadd [#allocation5], %s546
      %s548 = sshll.u32 [#allocation4], 4
      %s549 = int_to_ptr.vmem [resolvable:$true] %s548
      %554 = dma.vmem_to_hbm [thread:$0]  %s549, 256, %s4, [#allocation5], 128, 128, 8
    $region32: #{tpu_custom_call.1} parent=1 // pred_fallthru
      _
    // Predicated region
    $region33: #{tpu_custom_call.1} parent=1 // pred_check
      _
    $region34: #{tpu_custom_call.1} parent=1 // pred_check_branch
      %556 = sbr.rel (0) target = $region36
    $region35: #{tpu_custom_call.1} parent=1 // pred_region
      %557 = dma.done [#allocation5], 256
    $region36: #{tpu_custom_call.1} parent=1 // pred_fallthru
      _
    %558 = vsyncpa [#allocation5], 1

</llo_original>
